<compile_context>
chip_gen: v7x
topology: tpu7x:2x2x1
jax: 0.10.0
libtpu: 0.0.40
codegen_flags: <defaults>
</compile_context>

<pallas_src>
import functools

import jax
import jax.numpy as jnp
from jax.experimental import pallas as pl
from jax.experimental.pallas import tpu as pltpu

_LANE = 512  # lane-dense width (multiple of 128) -> unmasked full-lane stores


# --------------------------------------------------------------------------
# Kernel: y = x * c  (or x / c), c read once from SMEM.
# --------------------------------------------------------------------------
def _scale_kernel(const_ref, x_ref, o_ref, *, unnorm):
    c = const_ref[0]
    x = x_ref[...]
    if unnorm:
        o_ref[...] = (x / c).astype(o_ref.dtype)   # parity with torch `input / const`
    else:
        o_ref[...] = (x * c).astype(o_ref.dtype)


def _pallas_scale(x2d, const_arr, unnorm, tr, vmem_limit):
    """x2d: (R, _LANE) slab; tr: sublane tile (multiple of 8, or == R)."""
    R, L = x2d.shape
    nbytes = x2d.size * x2d.dtype.itemsize
    return pl.pallas_call(
        functools.partial(_scale_kernel, unnorm=unnorm),
        out_shape=jax.ShapeDtypeStruct(x2d.shape, x2d.dtype),
        grid=(pl.cdiv(R, tr),),
        in_specs=[
            pl.BlockSpec(memory_space=pltpu.SMEM),          # const scalar
            pl.BlockSpec((tr, L), lambda i: (i, 0)),        # input tile
        ],
        out_specs=pl.BlockSpec((tr, L), lambda i: (i, 0)),
        compiler_params=pltpu.CompilerParams(
            dimension_semantics=("parallel",),   # shard rows across v7x's 2 TCs
            vmem_limit_bytes=vmem_limit,
        ),
        cost_estimate=pl.CostEstimate(
            flops=x2d.size, transcendentals=0, bytes_accessed=2 * nbytes),
    )(const_arr, x2d)


# --------------------------------------------------------------------------
# Per-chip tiling policy.
# --------------------------------------------------------------------------
@functools.lru_cache(maxsize=1)
def _chip_params():
    """Returns (tr_max, vmem_limit_bytes) based on the chip's VMEM capacity."""
    try:
        vmem_cap = pltpu.get_tpu_info().vmem_capacity_bytes
    except Exception:  # conservative fallback if the query isn't available
        vmem_cap = 128 * 1024 * 1024
    if vmem_cap <= 80 * 1024 * 1024:
        # v7x-class (64 MiB VMEM/TC, fast HBM): 4 MiB blocks, 16 MiB with
        # double-buffered in+out -> raise the scoped-VMEM limit explicitly.
        return 2048, 40 << 20
    # v5e / v6e (128 MiB VMEM): 2 MiB blocks, 8 MiB double-buffered, fits
    # even v5e's 16 MiB scoped default; 32 MiB limit gives headroom.
    return 1024, 32 << 20


def _round_up(v, m):
    return ((v + m - 1) // m) * m


def _pick_tr(rows, tr_max):
    if rows <= 8:
        return rows                       # block == full sublane extent (legal)
    if rows <= 2 * tr_max:
        # Guarantee >= 2 grid steps so the "parallel" axis shards across both
        # TensorCores on v7x and pipelining overlaps DMA with compute.
        return _round_up(pl.cdiv(rows, 2), 8)
    return tr_max


# --------------------------------------------------------------------------
# Jitted forward: flatten -> lane-dense slab -> kernel (+ tiny jnp tail).
# --------------------------------------------------------------------------
@functools.partial(jax.jit, static_argnames=("unnorm",))
def _running_gradmag_forward(x, const_arr, *, unnorm):
    orig_shape = x.shape
    orig_dtype = x.dtype
    total = x.size
    if total == 0:
        return x

    tr_max, vmem_limit = _chip_params()

    flat = x.reshape(-1)
    n_main = (total // _LANE) * _LANE
    n_tail = total - n_main

    pieces = []
    if n_main:
        rows = n_main // _LANE
        if n_tail:
            x2d = flat[:n_main].reshape(rows, _LANE)
        else:
            x2d = flat.reshape(rows, _LANE)          # aligned: pure view
        tr = _pick_tr(rows, tr_max)
        y2d = _pallas_scale(x2d, const_arr, unnorm, tr, vmem_limit)
        pieces.append(y2d.reshape(-1))
    if n_tail:
        # <512 leftover elements: plain jnp scale (negligible), joined below.
        tail = flat[n_main:]
        c = const_arr[0]
        y_tail = (tail / c) if unnorm else (tail * c)
        pieces.append(y_tail.astype(orig_dtype))

    y = pieces[0] if len(pieces) == 1 else jnp.concatenate(pieces)
    return y.reshape(orig_shape)


class RunningGradMag:
    """JAX/Pallas port of cgac.utils_cgac.RunningGradMag (forward only)."""

    def __init__(self, insize, epsilon=1e-5, per_channel=False,
                 norm_only=False, const=1.0):
        self.insize = insize
        self.epsilon = epsilon
        self.const = float(const)
        self.norm_only = norm_only
        self.per_channel = per_channel

        if per_channel:
            if len(self.insize) == 3:
                self.axis = (0, 2, 3)
            if len(self.insize) == 2:
                self.axis = (0, 2)
            if len(self.insize) == 1:
                self.axis = (0,)
            in_size = self.insize[0]
        else:
            self.axis = (0,)
            in_size = insize

        # Buffers exist for parity with the PyTorch module but are dead in the
        # forward pass (current_mean is computed then discarded upstream).
        # torch uses float64; TPU default is f32.
        self.running_absmean = jnp.ones((in_size,), dtype=jnp.float32)
        self.count = jnp.ones((), dtype=jnp.float32)

        # const as a (1,) f32 array -> SMEM scalar input; no recompile if the
        # same-shaped module is built with a different const.
        self._const_arr = jnp.asarray([self.const], dtype=jnp.float32)

    def __call__(self, x, unnorm=False):
        return _running_gradmag_forward(x, self._const_arr, unnorm=bool(unnorm))


if __name__ == "__main__":
    key = jax.random.PRNGKey(0)
    k1, k2, k3 = jax.random.split(key, 3)

    # 1) Small NCHW input consistent with per_channel conv usage: insize=(C,H,W).
    N, C, H, W = 2, 4, 16, 16
    x = jax.random.normal(k1, (N, C, H, W), dtype=jnp.float32)
    mod = RunningGradMag(insize=(C, H, W), per_channel=True, const=2.0)
    y = jax.block_until_ready(mod(x, unnorm=False))
    y_un = jax.block_until_ready(mod(x, unnorm=True))
    assert y.shape == x.shape and y.dtype == x.dtype
    assert jnp.allclose(y, x * 2.0, atol=1e-6, rtol=1e-6)
    assert jnp.allclose(y_un, x / 2.0, atol=1e-6, rtol=1e-6)

    # 2) Larger aligned input -> exercises a multi-step grid (>=2 blocks).
    xl = jax.random.normal(k2, (8, 8, 32, 32), dtype=jnp.float32)
    mod_l = RunningGradMag(insize=(8, 32, 32), per_channel=True, const=1.5)
    yl = jax.block_until_ready(mod_l(xl, unnorm=False))
    assert yl.shape == xl.shape
    assert jnp.allclose(yl, xl * 1.5, atol=1e-6, rtol=1e-6)

    # 3) Ragged (non-512-aligned) input -> aligned-prefix kernel + jnp tail.
    xr = jax.random.normal(k3, (2, 3, 17, 23), dtype=jnp.float32)  # 2346 elems
    mod_r = RunningGradMag(insize=(3, 17, 23), per_channel=True, const=3.0)
    yr = jax.block_until_ready(mod_r(xr, unnorm=False))
    yr_un = jax.block_until_ready(mod_r(xr, unnorm=True))
    assert yr.shape == xr.shape
    assert jnp.allclose(yr, xr * 3.0, atol=1e-6, rtol=1e-6)
    assert jnp.allclose(yr_un, xr / 3.0, atol=1e-5, rtol=1e-5)

    print("KERNEL_OK")
</pallas_src>

<mosaic_0001>
module attributes {stable_mosaic.version = 11 : i64} {
  func.func @_scale_kernel(%arg0: i32, %arg1: memref<1xf32, #tpu.memory_space<smem>>, %arg2: memref<4x512xf32, #tpu.memory_space<vmem>>, %arg3: memref<4x512xf32, #tpu.memory_space<vmem>>) attributes {dimension_semantics = [#tpu.dimension_semantics<parallel>], iteration_bounds = array<i64: 1>, scalar_prefetch = 0 : i64, scratch_operands = 0 : i64, tpu.core_type = #tpu.core_type<tc>, window_params = [{transform_indices = @transform_0, window_bounds = array<i64: 1>}, {transform_indices = @transform_1, window_bounds = array<i64: 4, 512>}, {transform_indices = @transform_2, window_bounds = array<i64: 4, 512>}]} {
    %c0 = arith.constant 0 : index
    %0 = memref.load %arg1[%c0] : memref<1xf32, #tpu.memory_space<smem>>
    %c0_0 = arith.constant 0 : index
    %c0_1 = arith.constant 0 : index
    %1 = vector.load %arg2[%c0_0, %c0_1] : memref<4x512xf32, #tpu.memory_space<vmem>>, vector<4x512xf32>
    %2 = vector.broadcast %0 : f32 to vector<4x512xf32>
    %3 = arith.mulf %1, %2 : vector<4x512xf32>
    %c0_2 = arith.constant 0 : index
    %c0_3 = arith.constant 0 : index
    %4 = vector.load %arg3[%c0_2, %c0_3] : memref<4x512xf32, #tpu.memory_space<vmem>>, vector<4x512xf32>
    tpu.vector_store %arg3[%c0_2, %c0_3], %3 {strides = array<i32>} : memref<4x512xf32, #tpu.memory_space<vmem>>, vector<4x512xf32>,
    return
  }
  func.func @transform_0(%arg0: i32) -> i32 {
    %c0_i32 = arith.constant 0 : i32
    %c0_i32_0 = arith.constant 0 : i32
    return %c0_i32 : i32
  }
  func.func @transform_1(%arg0: i32) -> (i32, i32) {
    %c0_i32 = arith.constant 0 : i32
    %c0_i32_0 = arith.constant 0 : i32
    return %arg0, %c0_i32 : i32, i32
  }
  func.func @transform_2(%arg0: i32) -> (i32, i32) {
    %c0_i32 = arith.constant 0 : i32
    %c0_i32_0 = arith.constant 0 : i32
    return %arg0, %c0_i32 : i32, i32
  }
}

</mosaic_0001>

<llo_original>
// kernel: _running_gradmag_forward.1
$region0: #{_running_gradmag_forward.1}
  #allocation0 [shape = 'u32[]', space=smem, size = 0x4, offset = 0x4, fixed_abs, tag = 'smem constant byte address 0x4 - core index']
  #allocation1 [shape = 'u32[144,128]{1,0:T(1,128)}', space=vmem, size = 0x12000, scoped, tag = 'internal scratch']
  #allocation2 [shape = 'f32[1]{0:T(128)S(6)}', space=smem, size = 0x200, scoped, tag = 'scoped memory for _running_gradmag_forward.1']
  %s0 = inlined_call_operand.<no memory space> [shape: f32[1], index: 0, kind: input, shape index: {}]
  %s1 = inlined_call_operand.vmem [shape: f32[4,512], index: 1, kind: input, shape index: {}]
  %s2 = inlined_call_operand.vmem [shape: f32[4,512], index: 2, kind: output, shape index: {}]
  %s3 = sld [smem:[#allocation0]]
  $region18: #{_running_gradmag_forward.1} parent=0
    _
  %s5 = ssub.s32 1, %s3
  %s6 = scalar_select 0, %s5, %s3
  %7 = sst [smem:[#allocation2]] %s0
  // Predicated region
  $region2: #{_running_gradmag_forward.1} parent=0 // pred_check
    _
  $region3: #{_running_gradmag_forward.1} parent=0 // pred_check_branch
    %9 = sbr.rel (0) target = $region5
  $region4: #{_running_gradmag_forward.1} parent=0 // pred_region
    _
  $region5: #{_running_gradmag_forward.1} parent=0 // pred_fallthru
    _
  // Predicated region
  $region6: #{_running_gradmag_forward.1} parent=0 // pred_check
    _
  $region7: #{_running_gradmag_forward.1} parent=0 // pred_check_branch
    %11 = sbr.rel (0) target = $region9
  $region8: #{_running_gradmag_forward.1} parent=0 // pred_region
    _
  $region9: #{_running_gradmag_forward.1} parent=0 // pred_fallthru
    _
  %s12 = sld [smem:[#allocation2]]
  %v13 = vld [vmem:[%s1] sm:$0xff]
  %v14 = vld [vmem:[%s1 + $0x8] sm:$0xff]
  %v15 = vstv %s12
  %v16 = vmul.f32 %v13, %v15
  %v17 = vmul.f32 %v14, %v15
  %18 = vst [vmem:[%s2] sm:$0xff] %v16
  %19 = vst [vmem:[%s2 + $0x8] sm:$0xff] %v17
  // Predicated region
  $region10: #{_running_gradmag_forward.1} parent=0 // pred_check
    _
  $region11: #{_running_gradmag_forward.1} parent=0 // pred_check_branch
    %21 = sbr.rel (0) target = $region13
  $region12: #{_running_gradmag_forward.1} parent=0 // pred_region
    _
  $region13: #{_running_gradmag_forward.1} parent=0 // pred_fallthru
    _
  // Predicated region
  $region14: #{_running_gradmag_forward.1} parent=0 // pred_check
    _
  $region15: #{_running_gradmag_forward.1} parent=0 // pred_check_branch
    %23 = sbr.rel (0) target = $region17
  $region16: #{_running_gradmag_forward.1} parent=0 // pred_region
    _
  $region17: #{_running_gradmag_forward.1} parent=0 // pred_fallthru
    _

</llo_original>
